<compile_context>
chip_gen: v7x
topology: tpu7x:2x2x1
jax: 0.10.0
libtpu: 0.0.40
codegen_flags: <defaults>
</compile_context>

<pallas_src>
import jax
import jax.numpy as jnp
from jax.experimental import pallas as pl
from jax.experimental.pallas import tpu as pltpu


def _round_up(x, m):
    return ((x + m - 1) // m) * m


def _padded_bytes(shape, itemsize):
    """VMEM footprint of one block: last dim rounded to 128 lanes, second-last
    rounded to a full sublane tile for the dtype (f32: 8, bf16: 16)."""
    if len(shape) == 1:
        shape = (1,) + tuple(shape)
    lead = 1
    for d in shape[:-2]:
        lead *= int(d)
    sub_tile = max(1, 32 // itemsize)
    sub = _round_up(int(shape[-2]), sub_tile)
    lane = _round_up(int(shape[-1]), 128)
    return lead * sub * lane * itemsize


def _vmem_budget():
    """(block budget, scoped vmem limit) derived from the chip's VMEM size."""
    phys = 64 * 1024 * 1024                      # conservative default (v7x per-TC)
    try:
        phys = int(pltpu.get_tpu_info().vmem_capacity_bytes)
    except Exception:
        pass                                     # keep the safe default
    block_budget = int(phys * 0.45)              # blocks incl. double buffers
    vmem_limit = int(phys * 0.80)                # headroom for compiler scratch
    return block_budget, vmem_limit


def _choose_tb(B, L, fin, fp, budget_bytes, min_steps=4):
    """Largest divisor of B whose per-step (padded, double-buffered) footprint
    fits the VMEM budget, while keeping the grid length >= min_steps when B
    allows (v7x: 2 TensorCores, each still wants >= 2 steps to pipeline)."""

    def step_bytes(tb):
        total = 0
        total += 2 * _padded_bytes((tb * L, fin), 2)      # text   (bf16) x2 buf
        total += 2 * _padded_bytes((tb, L, L), 2)         # adj    (bf16) x2 buf
        total += 2 * _padded_bytes((fin, fp), 2)          # weight (bf16) x2 buf
        total += 2 * _padded_bytes((1, fp), 4)            # bias   (f32)  x2 buf
        total += 2 * _padded_bytes((tb, L, fp), 4)        # out    (f32)  x2 buf
        # single-buffered in-kernel intermediates
        total += _padded_bytes((tb * L, fp), 4)           # hidden (f32)
        total += _padded_bytes((tb, L, L), 4)             # adj upcast (f32)
        total += _padded_bytes((tb, L, fp), 4)            # accumulator (f32)
        return total

    steps = min(min_steps, B) if B > 1 else 1
    cap = max(1, B // max(steps, 1))
    best = 1
    for tb in range(1, cap + 1):
        if B % tb == 0 and step_bytes(tb) <= budget_bytes:
            best = tb
    return best


def gcn_kernel(text_ref, adj_ref, w_ref, b_ref, out_ref):
    # text_ref: (tb*L, Fin) bf16   adj_ref: (tb, L, L) bf16
    # w_ref:    (Fin, Fp)   bf16   b_ref:   (1, Fp)    f32
    # out_ref:  (tb, L, Fp) f32
    tb, L, _ = adj_ref.shape
    fp = w_ref.shape[1]

    # Feature transform: one fused (tb*L, Fin) @ (Fin, Fp) MXU matmul,
    # bf16 operands with f32 accumulation.
    hidden = jnp.dot(text_ref[...], w_ref[...],
                     preferred_element_type=jnp.float32)        # (tb*L, Fp) f32

    adj32 = adj_ref[...].astype(jnp.float32)                     # (tb, L, L)
    denom = jnp.sum(adj32, axis=2, keepdims=True) + 1.0          # XLU lane reduce
    inv_denom = pl.reciprocal(denom, approx=True)                # EUP slot (free-ish)

    if L >= 128:
        # Large L: batched MXU aggregation (bf16 in, f32 accumulate).
        agg = jnp.einsum('bij,bjd->bid', adj_ref[...],
                         hidden.astype(jnp.bfloat16).reshape(tb, L, fp),
                         preferred_element_type=jnp.float32)
    else:
        # Small L: VPU broadcast-multiply-accumulate over neighbors j.
        # Avoids tb tiny (L,L)@(L,Fp) matmuls that underutilize the 256-wide
        # MXU and pay the result-FIFO drain on v5e/v6e; VALU slots have slack.
        hidden3 = hidden.reshape(tb, L, fp)
        agg = jnp.zeros((tb, L, fp), dtype=jnp.float32)
        for j in range(L):                                       # static unroll
            agg = agg + adj32[:, :, j:j + 1] * hidden3[:, j:j + 1, :]

    out_ref[...] = agg * inv_denom + b_ref[...]                  # lane-dense store


def graph_convolution_forward(text, adj, weight, bias=None):
    B, L, fin = text.shape
    fout = weight.shape[1]
    fp = _round_up(fout, 128)                   # lane-dense (unmasked) output stores

    text2d = text.reshape(B * L, fin).astype(jnp.bfloat16)
    adj_b = adj.astype(jnp.bfloat16)            # exact for 0/1 adjacency
    w_p = jnp.pad(weight.astype(jnp.bfloat16), ((0, 0), (0, fp - fout)))
    if bias is None:
        bias_row = jnp.zeros((1, fp), jnp.float32)
    else:
        bias_row = jnp.pad(bias.astype(jnp.float32), (0, fp - fout)).reshape(1, fp)

    budget, vmem_limit = _vmem_budget()
    tb = _choose_tb(B, L, fin, fp, budget)
    grid = (B // tb,)

    out_p = pl.pallas_call(
        gcn_kernel,
        grid=grid,
        in_specs=[
            pl.BlockSpec((tb * L, fin), lambda b: (b, 0)),       # text (2-D)
            pl.BlockSpec((tb, L, L), lambda b: (b, 0, 0)),       # adj
            pl.BlockSpec((fin, fp), lambda b: (0, 0)),           # weight
            pl.BlockSpec((1, fp), lambda b: (0, 0)),             # bias
        ],
        out_specs=pl.BlockSpec((tb, L, fp), lambda b: (b, 0, 0)),
        out_shape=jax.ShapeDtypeStruct((B, L, fp), jnp.float32),
        compiler_params=pltpu.CompilerParams(
            dimension_semantics=("parallel",),
            vmem_limit_bytes=vmem_limit),
    )(text2d, adj_b, w_p, bias_row)

    return out_p if fp == fout else out_p[:, :, :fout]


def graph_convolution_reference(text, adj, weight, bias=None):
    """Pure-JAX f32 port of the PyTorch forward, for verification."""
    hidden = jnp.matmul(text, weight)
    denom = jnp.sum(adj, axis=2, keepdims=True) + 1.0
    out = jnp.matmul(adj, hidden) / denom
    if bias is not None:
        out = out + bias
    return out


if __name__ == "__main__":
    B, L, Fin, Fout = 2, 8, 32, 32
    key = jax.random.PRNGKey(0)
    kt, ka, kw, kb = jax.random.split(key, 4)

    text = jax.random.normal(kt, (B, L, Fin), dtype=jnp.float32)
    # adjacency: random 0/1 matrix with self-loops, like a typical dep-graph adj
    adj = (jax.random.uniform(ka, (B, L, L)) < 0.3).astype(jnp.float32)
    adj = jnp.maximum(adj, jnp.eye(L, dtype=jnp.float32)[None])

    bound = 1.0 / jnp.sqrt(jnp.float32(Fin))
    weight = jax.random.uniform(kw, (Fin, Fout), jnp.float32, -bound, bound)
    bias = jax.random.uniform(kb, (Fout,), jnp.float32, -bound, bound)

    out = graph_convolution_forward(text, adj, weight, bias)
    jax.block_until_ready(out)

    out_ref = graph_convolution_reference(text, adj, weight, bias)
    assert out.shape == (B, L, Fout)
    # bf16 MXU operands + approx reciprocal -> tolerance loosened vs. the pure
    # f32 version (per perf review); accumulation stays in f32.
    assert jnp.allclose(out, out_ref, atol=5e-2, rtol=5e-2)

    # also exercise the bias=None path of the module
    out_nb = graph_convolution_forward(text, adj, weight, None)
    jax.block_until_ready(out_nb)
    out_nb_ref = graph_convolution_reference(text, adj, weight, None)
    assert jnp.allclose(out_nb, out_nb_ref, atol=5e-2, rtol=5e-2)

    print("KERNEL_OK")
</pallas_src>

<mosaic_0001>
module attributes {stable_mosaic.version = 11 : i64} {
  func.func @gcn_kernel(%arg0: i32, %arg1: memref<8x32xbf16, #tpu.memory_space<vmem>>, %arg2: memref<1x8x8xbf16, #tpu.memory_space<vmem>>, %arg3: memref<32x128xbf16, #tpu.memory_space<vmem>>, %arg4: memref<1x128xf32, #tpu.memory_space<vmem>>, %arg5: memref<1x8x128xf32, #tpu.memory_space<vmem>>) attributes {dimension_semantics = [#tpu.dimension_semantics<parallel>], iteration_bounds = array<i64: 2>, scalar_prefetch = 0 : i64, scratch_operands = 0 : i64, tpu.core_type = #tpu.core_type<tc>, window_params = [{transform_indices = @transform_0, window_bounds = array<i64: 8, 32>}, {transform_indices = @transform_1, window_bounds = array<i64: 1, 8, 8>}, {pipeline_mode = #tpu.pipeline_mode<synchronous>, transform_indices = @transform_2, window_bounds = array<i64: 32, 128>}, {pipeline_mode = #tpu.pipeline_mode<synchronous>, transform_indices = @transform_3, window_bounds = array<i64: 1, 128>}, {transform_indices = @transform_4, window_bounds = array<i64: 1, 8, 128>}]} {
    %c0 = arith.constant 0 : index
    %c0_0 = arith.constant 0 : index
    %0 = vector.load %arg1[%c0, %c0_0] : memref<8x32xbf16, #tpu.memory_space<vmem>>, vector<8x32xbf16>
    %c0_1 = arith.constant 0 : index
    %c0_2 = arith.constant 0 : index
    %1 = vector.load %arg3[%c0_1, %c0_2] : memref<32x128xbf16, #tpu.memory_space<vmem>>, vector<32x128xbf16>
    %cst = arith.constant dense<0.000000e+00> : vector<8x128xf32>
    %2 = tpu.matmul %0, %1, %cst {dimension_numbers = #tpu.dot_dimension_numbers<[1], [0], [0], [1], [0, 0, 1, 1], [], []>} : vector<8x32xbf16>, vector<32x128xbf16>, vector<8x128xf32> -> vector<8x128xf32>
    %c0_3 = arith.constant 0 : index
    %c0_4 = arith.constant 0 : index
    %c0_5 = arith.constant 0 : index
    %3 = vector.load %arg2[%c0_3, %c0_4, %c0_5] : memref<1x8x8xbf16, #tpu.memory_space<vmem>>, vector<1x8x8xbf16>
    %4 = arith.extf %3 : vector<1x8x8xbf16> to vector<1x8x8xf32>
    %cst_6 = arith.constant dense<0.000000e+00> : vector<1x8xf32>
    %5 = vector.multi_reduction <add>, %4, %cst_6 [2] : vector<1x8x8xf32> to vector<1x8xf32>
    %6 = vector.shape_cast %5 : vector<1x8xf32> to vector<1x8x1xf32>
    %cst_7 = arith.constant 1.000000e+00 : f32
    %7 = vector.broadcast %cst_7 : f32 to vector<1x8x1xf32>
    %8 = arith.addf %6, %7 : vector<1x8x1xf32>
    %9 = tpu.reciprocal %8 {approx = true} : vector<1x8x1xf32> -> vector<1x8x1xf32>
    %10 = vector.shape_cast %2 : vector<8x128xf32> to vector<1x8x128xf32>
    %cst_8 = arith.constant 0.000000e+00 : f32
    %11 = vector.broadcast %cst_8 : f32 to vector<1x8x128xf32>
    %12 = vector.extract_strided_slice %4 {offsets = [0, 0, 0], sizes = [1, 8, 1], strides = [1, 1, 1]} : vector<1x8x8xf32> to vector<1x8x1xf32>
    %13 = vector.extract_strided_slice %10 {offsets = [0, 0, 0], sizes = [1, 1, 128], strides = [1, 1, 1]} : vector<1x8x128xf32> to vector<1x1x128xf32>
    %14 = vector.broadcast %12 : vector<1x8x1xf32> to vector<1x8x128xf32>
    %15 = vector.broadcast %13 : vector<1x1x128xf32> to vector<1x8x128xf32>
    %16 = arith.mulf %14, %15 : vector<1x8x128xf32>
    %17 = arith.addf %11, %16 : vector<1x8x128xf32>
    %18 = vector.extract_strided_slice %4 {offsets = [0, 0, 1], sizes = [1, 8, 1], strides = [1, 1, 1]} : vector<1x8x8xf32> to vector<1x8x1xf32>
    %19 = vector.extract_strided_slice %10 {offsets = [0, 1, 0], sizes = [1, 1, 128], strides = [1, 1, 1]} : vector<1x8x128xf32> to vector<1x1x128xf32>
    %20 = vector.broadcast %18 : vector<1x8x1xf32> to vector<1x8x128xf32>
    %21 = vector.broadcast %19 : vector<1x1x128xf32> to vector<1x8x128xf32>
    %22 = arith.mulf %20, %21 : vector<1x8x128xf32>
    %23 = arith.addf %17, %22 : vector<1x8x128xf32>
    %24 = vector.extract_strided_slice %4 {offsets = [0, 0, 2], sizes = [1, 8, 1], strides = [1, 1, 1]} : vector<1x8x8xf32> to vector<1x8x1xf32>
    %25 = vector.extract_strided_slice %10 {offsets = [0, 2, 0], sizes = [1, 1, 128], strides = [1, 1, 1]} : vector<1x8x128xf32> to vector<1x1x128xf32>
    %26 = vector.broadcast %24 : vector<1x8x1xf32> to vector<1x8x128xf32>
    %27 = vector.broadcast %25 : vector<1x1x128xf32> to vector<1x8x128xf32>
    %28 = arith.mulf %26, %27 : vector<1x8x128xf32>
    %29 = arith.addf %23, %28 : vector<1x8x128xf32>
    %30 = vector.extract_strided_slice %4 {offsets = [0, 0, 3], sizes = [1, 8, 1], strides = [1, 1, 1]} : vector<1x8x8xf32> to vector<1x8x1xf32>
    %31 = vector.extract_strided_slice %10 {offsets = [0, 3, 0], sizes = [1, 1, 128], strides = [1, 1, 1]} : vector<1x8x128xf32> to vector<1x1x128xf32>
    %32 = vector.broadcast %30 : vector<1x8x1xf32> to vector<1x8x128xf32>
    %33 = vector.broadcast %31 : vector<1x1x128xf32> to vector<1x8x128xf32>
    %34 = arith.mulf %32, %33 : vector<1x8x128xf32>
    %35 = arith.addf %29, %34 : vector<1x8x128xf32>
    %36 = vector.extract_strided_slice %4 {offsets = [0, 0, 4], sizes = [1, 8, 1], strides = [1, 1, 1]} : vector<1x8x8xf32> to vector<1x8x1xf32>
    %37 = vector.extract_strided_slice %10 {offsets = [0, 4, 0], sizes = [1, 1, 128], strides = [1, 1, 1]} : vector<1x8x128xf32> to vector<1x1x128xf32>
    %38 = vector.broadcast %36 : vector<1x8x1xf32> to vector<1x8x128xf32>
    %39 = vector.broadcast %37 : vector<1x1x128xf32> to vector<1x8x128xf32>
    %40 = arith.mulf %38, %39 : vector<1x8x128xf32>
    %41 = arith.addf %35, %40 : vector<1x8x128xf32>
    %42 = vector.extract_strided_slice %4 {offsets = [0, 0, 5], sizes = [1, 8, 1], strides = [1, 1, 1]} : vector<1x8x8xf32> to vector<1x8x1xf32>
    %43 = vector.extract_strided_slice %10 {offsets = [0, 5, 0], sizes = [1, 1, 128], strides = [1, 1, 1]} : vector<1x8x128xf32> to vector<1x1x128xf32>
    %44 = vector.broadcast %42 : vector<1x8x1xf32> to vector<1x8x128xf32>
    %45 = vector.broadcast %43 : vector<1x1x128xf32> to vector<1x8x128xf32>
    %46 = arith.mulf %44, %45 : vector<1x8x128xf32>
    %47 = arith.addf %41, %46 : vector<1x8x128xf32>
    %48 = vector.extract_strided_slice %4 {offsets = [0, 0, 6], sizes = [1, 8, 1], strides = [1, 1, 1]} : vector<1x8x8xf32> to vector<1x8x1xf32>
    %49 = vector.extract_strided_slice %10 {offsets = [0, 6, 0], sizes = [1, 1, 128], strides = [1, 1, 1]} : vector<1x8x128xf32> to vector<1x1x128xf32>
    %50 = vector.broadcast %48 : vector<1x8x1xf32> to vector<1x8x128xf32>
    %51 = vector.broadcast %49 : vector<1x1x128xf32> to vector<1x8x128xf32>
    %52 = arith.mulf %50, %51 : vector<1x8x128xf32>
    %53 = arith.addf %47, %52 : vector<1x8x128xf32>
    %54 = vector.extract_strided_slice %4 {offsets = [0, 0, 7], sizes = [1, 8, 1], strides = [1, 1, 1]} : vector<1x8x8xf32> to vector<1x8x1xf32>
    %55 = vector.extract_strided_slice %10 {offsets = [0, 7, 0], sizes = [1, 1, 128], strides = [1, 1, 1]} : vector<1x8x128xf32> to vector<1x1x128xf32>
    %56 = vector.broadcast %54 : vector<1x8x1xf32> to vector<1x8x128xf32>
    %57 = vector.broadcast %55 : vector<1x1x128xf32> to vector<1x8x128xf32>
    %58 = arith.mulf %56, %57 : vector<1x8x128xf32>
    %59 = arith.addf %53, %58 : vector<1x8x128xf32>
    %60 = vector.broadcast %9 : vector<1x8x1xf32> to vector<1x8x128xf32>
    %61 = arith.mulf %59, %60 : vector<1x8x128xf32>
    %c0_9 = arith.constant 0 : index
    %c0_10 = arith.constant 0 : index
    %62 = vector.load %arg4[%c0_9, %c0_10] : memref<1x128xf32, #tpu.memory_space<vmem>>, vector<1x128xf32>
    %63 = vector.shape_cast %62 : vector<1x128xf32> to vector<1x1x128xf32>
    %64 = vector.broadcast %63 : vector<1x1x128xf32> to vector<1x8x128xf32>
    %65 = arith.addf %61, %64 : vector<1x8x128xf32>
    %c0_11 = arith.constant 0 : index
    %c0_12 = arith.constant 0 : index
    %c0_13 = arith.constant 0 : index
    %66 = vector.load %arg5[%c0_11, %c0_12, %c0_13] : memref<1x8x128xf32, #tpu.memory_space<vmem>>, vector<1x8x128xf32>
    tpu.vector_store %arg5[%c0_11, %c0_12, %c0_13], %65 {strides = array<i32>} : memref<1x8x128xf32, #tpu.memory_space<vmem>>, vector<1x8x128xf32>,
    return
  }
  func.func @transform_0(%arg0: i32) -> (i32, i32) {
    %c0_i32 = arith.constant 0 : i32
    %c0_i32_0 = arith.constant 0 : i32
    return %arg0, %c0_i32 : i32, i32
  }
  func.func @transform_1(%arg0: i32) -> (i32, i32, i32) {
    %c0_i32 = arith.constant 0 : i32
    %c0_i32_0 = arith.constant 0 : i32
    %c0_i32_1 = arith.constant 0 : i32
    return %arg0, %c0_i32, %c0_i32_0 : i32, i32, i32
  }
  func.func @transform_2(%arg0: i32) -> (i32, i32) {
    %c0_i32 = arith.constant 0 : i32
    %c0_i32_0 = arith.constant 0 : i32
    %c0_i32_1 = arith.constant 0 : i32
    return %c0_i32, %c0_i32_0 : i32, i32
  }
  func.func @transform_3(%arg0: i32) -> (i32, i32) {
    %c0_i32 = arith.constant 0 : i32
    %c0_i32_0 = arith.constant 0 : i32
    %c0_i32_1 = arith.constant 0 : i32
    return %c0_i32, %c0_i32_0 : i32, i32
  }
  func.func @transform_4(%arg0: i32) -> (i32, i32, i32) {
    %c0_i32 = arith.constant 0 : i32
    %c0_i32_0 = arith.constant 0 : i32
    %c0_i32_1 = arith.constant 0 : i32
    return %arg0, %c0_i32, %c0_i32_0 : i32, i32, i32
  }
}

</mosaic_0001>

<llo_original>
// kernel: tpu_custom_call.1
$region0: #{tpu_custom_call.1}
  #allocation0 [shape = 'u32[]', space=smem, size = 0x4, offset = 0x4, fixed_abs, tag = 'smem constant byte address 0x4 - core index']
  #allocation1 [shape = 'u32[144,128]{1,0:T(1,128)}', space=vmem, size = 0x12000, scoped, tag = 'internal scratch']
  %s0 = inlined_call_operand.hbm [shape: bf16[16,32], index: 0, kind: input, shape index: {}]
  %s1 = inlined_call_operand.hbm [shape: bf16[2,8,8], index: 1, kind: input, shape index: {}]
  %s2 = inlined_call_operand.hbm [shape: bf16[32,128], index: 2, kind: input, shape index: {}]
  %s3 = inlined_call_operand.vmem [shape: f32[1,128], index: 3, kind: input, shape index: {}]
  %s4 = inlined_call_operand.hbm [shape: f32[2,8,128], index: 4, kind: output, shape index: {}]
  %s5 = sld [smem:[#allocation0]]
  $region61: #{tpu_custom_call.1} parent=0
    _
  %s7 = ssub.s32 1, %s5
  %s8 = scalar_select 0, %s7, %s5
  $region1: #{tpu_custom_call.1} parent=0
    #allocation2 [shape = 'u8[4096]{0}', space=vmem, size = 0x1000, scoped, tag = 'input window, operand 0']
    #allocation3 [shape = 's32[2]{0}', space=sflag, size = 0x8, scoped, tag = 'scoped memory for tpu_custom_call.1']
    #allocation4 [shape = 's32[2]{0}', space=sflag, size = 0x8, scoped, tag = 'scoped memory for tpu_custom_call.1']
    #allocation5 [shape = 'u8[4096]{0}', space=vmem, size = 0x1000, scoped, tag = 'input window, operand 1']
    #allocation6 [shape = 's32[2]{0}', space=sflag, size = 0x8, scoped, tag = 'scoped memory for tpu_custom_call.1']
    #allocation7 [shape = 'u8[8192]{0}', space=vmem, size = 0x2000, scoped, tag = 'input window, operand 2, single buffered']
    #allocation8 [shape = 'u8[8192]{0}', space=vmem, size = 0x2000, scoped, tag = 'output window, operand 0']
    %9 = vsyncpa [#allocation3], 0
    %s10 = scalar_lea.sflag [#allocation3], 1
    %11 = vsyncpa %s10, 0
    %12 = vsyncpa [#allocation6], 0
    %s13 = scalar_lea.sflag [#allocation6], 1
    %14 = vsyncpa %s13, 0
    %15 = vsyncpa [#allocation4], 0
    %s16 = scalar_lea.sflag [#allocation4], 1
    %17 = vsyncpa %s16, 0
    loop: start=0, step=1, limit=4
    $region2: #{tpu_custom_call.1} parent=1 // loop_pre_header
      _
    $region3: #{tpu_custom_call.1} parent=1 // loop_header
      %s19 = sphi 0, %s23
      %p20 = scmp.ge.s32.totalorder %s19, 4
      %s29 = sphi 0, %s31
      %s32 = sphi 0, %s29
      %s33 = sphi 0, %s32
      %s49 = sphi 0, %s33
      %s55 = sphi 0, %s57
      %s58 = sphi 0, %s55
      %s59 = sphi 0, %s58
      %s75 = sphi 0, %s59
      %s79 = sphi 0, %s79
      %s81 = sphi 0, %s79
      %s82 = sphi 0, %s81
      %s96 = sphi 0, %s82
      %s100 = sphi 0, %s100
      %s102 = sphi 0, %s100
      %s103 = sphi 0, %s102
      %s117 = sphi 0, %s103
      %s123 = sphi 0, %s125
      %s126 = sphi 0, %s123
      %s127 = sphi 0, %s126
      %s143 = sphi 0, %s127
    $region4: #{tpu_custom_call.1} parent=1 // loop_header_branch
      %22 = sbr.rel (%p20) target = $region8
    $region5: #{tpu_custom_call.1} parent=1 // loop_body
      %s24 = ssub.s32 %s19, 1
      %s25 = ssub.s32 %s19, 2
      %s26 = sadd.s32 %s19, 1
      %s27 = ssub.s32 %s19, %s26
      %p28 = scmp.eq.s32.totalorder %s27, 0
      %s30 = sadd.s32 %s29, 1
      %s31 = scalar_select %p28, %s29, %s30
      %p34 = pneg %p28
      %p35 = scmp.eq.s32.totalorder %s19, 1
      %p36 = por %p34, %p35
      %p37 = scmp.ne.s32.totalorder %s29, %s32
      %p38 = scmp.eq.s32.totalorder %s19, 0
      %p39 = por %p37, %p38
      %p40 = scmp.ne.s32.totalorder %s29, %s32
      %p41 = scmp.eq.s32.totalorder %s24, 1
      %p42 = por %p40, %p41
      %p43 = scmp.ne.s32.totalorder %s32, %s33
      %p44 = scmp.eq.s32.totalorder %s24, 0
      %p45 = por %p43, %p44
      %p46 = scmp.ne.s32.totalorder %s32, %s33
      %p47 = scmp.eq.s32.totalorder %s25, 1
      %p48 = por %p46, %p47
      %p50 = scmp.ne.s32.totalorder %s33, %s49
      %p51 = scmp.eq.s32.totalorder %s25, 0
      %p52 = por %p50, %p51
      %s53 = ssub.s32 %s19, %s26
      %p54 = scmp.eq.s32.totalorder %s53, 0
      %s56 = sadd.s32 %s55, 1
      %s57 = scalar_select %p54, %s55, %s56
      %p60 = pneg %p54
      %p61 = scmp.eq.s32.totalorder %s19, 1
      %p62 = por %p60, %p61
      %p63 = scmp.ne.s32.totalorder %s55, %s58
      %p64 = scmp.eq.s32.totalorder %s19, 0
      %p65 = por %p63, %p64
      %p66 = scmp.ne.s32.totalorder %s55, %s58
      %p67 = scmp.eq.s32.totalorder %s24, 1
      %p68 = por %p66, %p67
      %p69 = scmp.ne.s32.totalorder %s58, %s59
      %p70 = scmp.eq.s32.totalorder %s24, 0
      %p71 = por %p69, %p70
      %p72 = scmp.ne.s32.totalorder %s58, %s59
      %p73 = scmp.eq.s32.totalorder %s25, 1
      %p74 = por %p72, %p73
      %p76 = scmp.ne.s32.totalorder %s59, %s75
      %p77 = scmp.eq.s32.totalorder %s25, 0
      %p78 = por %p76, %p77
      %s80 = sadd.s32 %s79, 1
      %p83 = scmp.eq.s32.totalorder %s19, 1
      %p84 = scmp.ne.s32.totalorder %s79, %s81
      %p85 = scmp.eq.s32.totalorder %s19, 0
      %p86 = por %p84, %p85
      %p87 = scmp.ne.s32.totalorder %s79, %s81
      %p88 = scmp.eq.s32.totalorder %s24, 1
      %p89 = por %p87, %p88
      %p90 = scmp.ne.s32.totalorder %s81, %s82
      %p91 = scmp.eq.s32.totalorder %s24, 0
      %p92 = por %p90, %p91
      %p93 = scmp.ne.s32.totalorder %s81, %s82
      %p94 = scmp.eq.s32.totalorder %s25, 1
      %p95 = por %p93, %p94
      %p97 = scmp.ne.s32.totalorder %s82, %s96
      %p98 = scmp.eq.s32.totalorder %s25, 0
      %p99 = por %p97, %p98
      %s101 = sadd.s32 %s100, 1
      %p104 = scmp.eq.s32.totalorder %s19, 1
      %p105 = scmp.ne.s32.totalorder %s100, %s102
      %p106 = scmp.eq.s32.totalorder %s19, 0
      %p107 = por %p105, %p106
      %p108 = scmp.ne.s32.totalorder %s100, %s102
      %p109 = scmp.eq.s32.totalorder %s24, 1
      %p110 = por %p108, %p109
      %p111 = scmp.ne.s32.totalorder %s102, %s103
      %p112 = scmp.eq.s32.totalorder %s24, 0
      %p113 = por %p111, %p112
      %p114 = scmp.ne.s32.totalorder %s102, %s103
      %p115 = scmp.eq.s32.totalorder %s25, 1
      %p116 = por %p114, %p115
      %p118 = scmp.ne.s32.totalorder %s103, %s117
      %p119 = scmp.eq.s32.totalorder %s25, 0
      %p120 = por %p118, %p119
      %s121 = ssub.s32 %s19, %s26
      %p122 = scmp.eq.s32.totalorder %s121, 0
      %s124 = sadd.s32 %s123, 1
      %s125 = scalar_select %p122, %s123, %s124
      %p128 = pneg %p122
      %p129 = scmp.eq.s32.totalorder %s19, 1
      %p130 = por %p128, %p129
      %p131 = scmp.ne.s32.totalorder %s123, %s126
      %p132 = scmp.eq.s32.totalorder %s19, 0
      %p133 = por %p131, %p132
      %p134 = scmp.ne.s32.totalorder %s123, %s126
      %p135 = scmp.eq.s32.totalorder %s24, 1
      %p136 = por %p134, %p135
      %p137 = scmp.ne.s32.totalorder %s126, %s127
      %p138 = scmp.eq.s32.totalorder %s24, 0
      %p139 = por %p137, %p138
      %p140 = scmp.ne.s32.totalorder %s126, %s127
      %p141 = scmp.eq.s32.totalorder %s25, 1
      %p142 = por %p140, %p141
      %p144 = scmp.ne.s32.totalorder %s127, %s143
      %p145 = scmp.eq.s32.totalorder %s25, 0
      %p146 = por %p144, %p145
      %p147 = scmp.le.s32.totalorder 1, %s19
      %p148 = scmp.lt.s32.totalorder %s19, 3
      %p149 = pnand %p147, %p148
      %p150 = pneg %p149
      // Predicated region
      $region9: #{tpu_custom_call.1} parent=5 // pred_check
        _
      $region10: #{tpu_custom_call.1} parent=5 // pred_check_branch
        %152 = sbr.rel (%p149) target = $region12
      $region11: #{tpu_custom_call.1} parent=5 // pred_region
        %s153 = ssub.s32 %s19, 1
        // Predicated region
        $region13: #{tpu_custom_call.1} parent=11 // pred_check
          %p154 = pneg %p92
        $region14: #{tpu_custom_call.1} parent=11 // pred_check_branch
          %156 = sbr.rel (%p154) target = $region16
        $region15: #{tpu_custom_call.1} parent=11 // pred_region
          %s158 = ssub.s32 256, 256
          %159 = vsyncadd [#allocation6], %s158
          %s160 = sshll.u32 [#allocation7], 4
          %s161 = int_to_ptr.vmem [resolvable:$true] %s160
          %166 = dma.hbm_to_vmem [thread:$0]  %s2, 256, %s161, [#allocation6], 64, 64, 4
        $region16: #{tpu_custom_call.1} parent=11 // pred_fallthru
          _
        // Predicated region
        $region17: #{tpu_custom_call.1} parent=11 // pred_check
          %p167 = pneg %p113
        $region18: #{tpu_custom_call.1} parent=11 // pred_check_branch
          %169 = sbr.rel (%p167) target = $region20
        $region19: #{tpu_custom_call.1} parent=11 // pred_region
          _
        $region20: #{tpu_custom_call.1} parent=11 // pred_fallthru
          _
      $region12: #{tpu_custom_call.1} parent=5 // pred_fallthru
        _
      %p170 = scmp.lt.s32.totalorder %s19, 2
      // Predicated region
      $region21: #{tpu_custom_call.1} parent=5 // pred_check
        %p171 = pneg %p170
      $region22: #{tpu_custom_call.1} parent=5 // pred_check_branch
        %173 = sbr.rel (%p171) target = $region24
      $region23: #{tpu_custom_call.1} parent=5 // pred_region
        // Predicated region
        $region25: #{tpu_custom_call.1} parent=23 // pred_check
          %p174 = pneg %p39
        $region26: #{tpu_custom_call.1} parent=23 // pred_check_branch
          %176 = sbr.rel (%p174) target = $region28
        $region27: #{tpu_custom_call.1} parent=23 // pred_region
          %s177 = sand.u32 %s29, 1
          %s178 = scalar_lea.sflag [#allocation3], %s177
          %s179 = sand.u32 %s29, 1
          %s180 = smul.addr %s179, 4
          %s181 = scalar_lea.vmem [#allocation2], %s180
          %s183 = ssub.s32 64, 64
          %184 = vsyncadd %s178, %s183
          %s185 = smul.addr %s19, 64
          %s186 = scalar_lea.hbm %s0, %s185
          %s188 = sshll.u32 %s181, 4
          %s189 = int_to_ptr.vmem [resolvable:$true] %s188
          %191 = dma.hbm_to_vmem [thread:$0]  %s186, 64, %s189, %s178
        $region28: #{tpu_custom_call.1} parent=23 // pred_fallthru
          _
        // Predicated region
        $region29: #{tpu_custom_call.1} parent=23 // pred_check
          %p192 = pneg %p65
        $region30: #{tpu_custom_call.1} parent=23 // pred_check_branch
          %194 = sbr.rel (%p192) target = $region32
        $region31: #{tpu_custom_call.1} parent=23 // pred_region
          %s195 = sand.u32 %s19, 1
          %s196 = scalar_lea.sflag [#allocation6], %s195
          %s197 = sand.u32 %s55, 1
          %s198 = smul.addr %s197, 4
          %s199 = scalar_lea.vmem [#allocation5], %s198
          %s201 = ssub.s32 64, 64
          %202 = vsyncadd %s196, %s201
          %s203 = smul.addr %s19, 64
          %s204 = scalar_lea.hbm %s1, %s203
          %s206 = sshll.u32 %s199, 4
          %s207 = int_to_ptr.vmem [resolvable:$true] %s206
          %209 = dma.hbm_to_vmem [thread:$0]  %s204, 64, %s207, %s196
        $region32: #{tpu_custom_call.1} parent=23 // pred_fallthru
          _
      $region24: #{tpu_custom_call.1} parent=5 // pred_fallthru
        _
      %p210 = scmp.le.s32.totalorder 1, %s19
      %p211 = scmp.lt.s32.totalorder %s19, 3
      %p212 = pnand %p210, %p211
      %p213 = pneg %p212
      // Predicated region
      $region33: #{tpu_custom_call.1} parent=5 // pred_check
        _
      $region34: #{tpu_custom_call.1} parent=5 // pred_check_branch
        %215 = sbr.rel (%p212) target = $region36
      $region35: #{tpu_custom_call.1} parent=5 // pred_region
        %s216 = ssub.s32 %s19, 1
        %s217 = sand.u32 %s32, 1
        %s218 = scalar_lea.sflag [#allocation3], %s217
        %s219 = sand.u32 %s32, 1
        %s220 = smul.addr %s219, 4
        %s221 = scalar_lea.vmem [#allocation2], %s220
        // Predicated region
        $region37: #{tpu_custom_call.1} parent=35 // pred_check
          %p222 = pneg %p45
        $region38: #{tpu_custom_call.1} parent=35 // pred_check_branch
          %224 = sbr.rel (%p222) target = $region40
        $region39: #{tpu_custom_call.1} parent=35 // pred_region
          %225 = dma.done %s218, 64
        $region40: #{tpu_custom_call.1} parent=35 // pred_fallthru
          _
        %s226 = sand.u32 %s24, 1
        %s227 = scalar_lea.sflag [#allocation6], %s226
        %s228 = sand.u32 %s58, 1
        %s229 = smul.addr %s228, 4
        %s230 = scalar_lea.vmem [#allocation5], %s229
        // Predicated region
        $region41: #{tpu_custom_call.1} parent=35 // pred_check
          %p231 = pneg %p71
        $region42: #{tpu_custom_call.1} parent=35 // pred_check_branch
          %233 = sbr.rel (%p231) target = $region44
        $region43: #{tpu_custom_call.1} parent=35 // pred_region
          %234 = dma.done %s227, 64
        $region44: #{tpu_custom_call.1} parent=35 // pred_fallthru
          _
        // Predicated region
        $region45: #{tpu_custom_call.1} parent=35 // pred_check
          %p235 = pneg %p92
        $region46: #{tpu_custom_call.1} parent=35 // pred_check_branch
          %237 = sbr.rel (%p235) target = $region48
        $region47: #{tpu_custom_call.1} parent=35 // pred_region
          %238 = dma.done [#allocation6], 256
        $region48: #{tpu_custom_call.1} parent=35 // pred_fallthru
          _
        %s239 = sand.u32 %s32, 1
        %s240 = scalar_lea.sflag [#allocation3], %s239
        %s241 = sand.u32 %s32, 1
        %s242 = smul.addr %s241, 4
        %s243 = scalar_lea.vmem [#allocation2], %s242
        %p244 = pneg %p45
        %p245 = pneg %p42
        %s246 = sand.u32 %s24, 1
        %s247 = scalar_lea.sflag [#allocation6], %s246
        %s248 = sand.u32 %s58, 1
        %s249 = smul.addr %s248, 4
        %s250 = scalar_lea.vmem [#allocation5], %s249
        %p251 = pneg %p71
        %p252 = pneg %p68
        %p253 = pneg %p92
        %p254 = pneg %p89
        %p255 = pneg %p113
        %p256 = pneg %p110
        %p257 = pneg %p139
        %p258 = pneg %p136
        %s259 = sand.u32 %s126, 1
        %s260 = scalar_lea.sflag [#allocation4], %s259
        %s261 = sand.u32 %s126, 1
        %s262 = smul.addr %s261, 8
        %s263 = scalar_lea.vmem [#allocation8], %s262
        %v265 = vld [vmem:[%s221] sm:$0xf]
        %v266 = vld [vmem:[#allocation7] sm:$0xf]
        %v267 = vld [vmem:[#allocation7 + $0x4] sm:$0xf]
        %v268 = vld [vmem:[#allocation7 + $0x8] sm:$0xf]
        %v269 = vld [vmem:[#allocation7 + $0xc] sm:$0xf]
        %v274 = vunpack.c.l.b16 %v266
        %v275 = vunpack.c.l.b16 %v267
        %v276 = vunpack.c.l.b16 %v268
        %v277 = vunpack.c.l.b16 %v269
        %v278 = vpack.c.b16 %v275, %v274
        %v279 = vpack.c.b16 %v277, %v276
        %vm282 = vcmask 261120
        %v284 = vsel %vm282, %v265, 0
        %286 = vmatprep.subr.bf16.mxu0 0
        %287 = vmatpush1.bf16.msra.mxu0 %v278
        %288 = vmatprep.subr.bf16.mxu0 0
        %289 = vmatpush1.bf16.msra.mxu0 %v279
        %290 = vmatprep.subr.bf16.mxu0 0
        %291 = vmatpush1.bf16.msra.mxu0 0
        %292 = vmatprep.subr.bf16.mxu0 0
        %293 = vmatpush1.bf16.msra.mxu0 0
        %294 = vmatprep.subr.bf16.mxu0 0
        %295 = vmatpush1.bf16.msra.mxu0 0
        %296 = vmatprep.subr.bf16.mxu0 0
        %297 = vmatpush1.bf16.msra.mxu0 0
        %298 = vmatprep.subr.bf16.mxu0 0
        %299 = vmatpush1.bf16.msra.mxu0 0
        %300 = vmatprep.subr.bf16.mxu0 0
        %301 = vmatpush1.bf16.msra.mxu0 0
        %302 = vmatprep.subr.bf16.mxu0 0
        %303 = vmatpush1.bf16.msra.mxu0 0
        %304 = vmatprep.subr.bf16.mxu0 0
        %305 = vmatpush1.bf16.msra.mxu0 0
        %306 = vmatprep.subr.bf16.mxu0 0
        %307 = vmatpush1.bf16.msra.mxu0 0
        %308 = vmatprep.subr.bf16.mxu0 0
        %309 = vmatpush1.bf16.msra.mxu0 0
        %310 = vmatprep.subr.bf16.mxu0 0
        %311 = vmatpush1.bf16.msra.mxu0 0
        %312 = vmatprep.subr.bf16.mxu0 0
        %313 = vmatpush1.bf16.msra.mxu0 0
        %314 = vmatprep.subr.bf16.mxu0 0
        %315 = vmatpush1.bf16.msra.mxu0 0
        %316 = vmatprep.subr.bf16.mxu0 0
        %317 = vmatpush1.bf16.msra.mxu0 0
        %318 = vmatprep.mubr.bf16.mxu0 0
        %319 = vmatmul.mubr.bf16.gmra.mrb[0].mxu0 %v284
        %v320 = vpop.f32.mrb[0].mxu0
        %v321 = vadd.f32 0.0, %v320
        %v322 = vpop.f32.mrb[0].mxu0
        %v323 = vpop.f32.mrb[0].mxu0
        %v324 = vpop.f32.mrb[0].mxu0
        %325 = vdwg.mxu0
        %v326 = vld [vmem:[%s230] sm:$0xf]
        %v327 = vunpack.c.l.bf16 %v326
        %vm328 = vcmask 64512
        %v329 = vsel %vm328, %v327, 0.0
        %330 = vadd.xlane.f32.xlu0 %v329
        %v331 = vpop.xlane.xlu0 %330
        %v332 = vadd.f32 %v331, 1.0
        %v333 = vrcp.pop %v332
        %335 = vset.pattern.permute.xlu0 0
        %336 = vperm.xlu0 %335, %v327
        %v337 = vpop.permute.xlu0 %336
        %v339 = vlaneseq
        %v340 = vshrl.u32 %v339, 7
        %v341 = vsub.s32 0, %v340
        %v342 = vrot.slane %v321, %v341
        %v343 = vmul.f32 %v337, %v342
        %v344 = vadd.f32 %v343, 0.0
        %345 = vset.pattern.permute.xlu0 1
        %346 = vperm.xlu0 %345, %v327
        %v347 = vpop.permute.xlu0 %346
        %v349 = vlaneseq
        %v350 = vshrl.u32 %v349, 7
        %v351 = vsub.s32 1, %v350
        %v352 = vrot.slane %v321, %v351
        %v353 = vmul.f32 %v347, %v352
        %v354 = vadd.f32 %v344, %v353
        %355 = vset.pattern.permute.xlu0 2
        %356 = vperm.xlu0 %355, %v327
        %v357 = vpop.permute.xlu0 %356
        %v359 = vlaneseq
        %v360 = vshrl.u32 %v359, 7
        %v361 = vsub.s32 2, %v360
        %v362 = vrot.slane %v321, %v361
        %v363 = vmul.f32 %v357, %v362
        %v364 = vadd.f32 %v354, %v363
        %365 = vset.pattern.permute.xlu0 3
        %366 = vperm.xlu0 %365, %v327
        %v367 = vpop.permute.xlu0 %366
        %v369 = vlaneseq
        %v370 = vshrl.u32 %v369, 7
        %v371 = vsub.s32 3, %v370
        %v372 = vrot.slane %v321, %v371
        %v373 = vmul.f32 %v367, %v372
        %v374 = vadd.f32 %v364, %v373
        %375 = vset.pattern.permute.xlu0 4
        %376 = vperm.xlu0 %375, %v327
        %v377 = vpop.permute.xlu0 %376
        %v379 = vlaneseq
        %v380 = vshrl.u32 %v379, 7
        %v381 = vsub.s32 4, %v380
        %v382 = vrot.slane %v321, %v381
        %v383 = vmul.f32 %v377, %v382
        %v384 = vadd.f32 %v374, %v383
        %385 = vset.pattern.permute.xlu0 5
        %386 = vperm.xlu0 %385, %v327
        %v387 = vpop.permute.xlu0 %386
        %v389 = vlaneseq
        %v390 = vshrl.u32 %v389, 7
        %v391 = vsub.s32 5, %v390
        %v392 = vrot.slane %v321, %v391
        %v393 = vmul.f32 %v387, %v392
        %v394 = vadd.f32 %v384, %v393
        %395 = vset.pattern.permute.xlu0 6
        %396 = vperm.xlu0 %395, %v327
        %v397 = vpop.permute.xlu0 %396
        %v399 = vlaneseq
        %v400 = vshrl.u32 %v399, 7
        %v401 = vsub.s32 6, %v400
        %v402 = vrot.slane %v321, %v401
        %v403 = vmul.f32 %v397, %v402
        %v404 = vadd.f32 %v394, %v403
        %405 = vset.pattern.permute.xlu0 7
        %406 = vperm.xlu0 %405, %v327
        %v407 = vpop.permute.xlu0 %406
        %v409 = vlaneseq
        %v410 = vshrl.u32 %v409, 7
        %v411 = vsub.s32 7, %v410
        %v412 = vrot.slane %v321, %v411
        %v413 = vmul.f32 %v407, %v412
        %v414 = vadd.f32 %v404, %v413
        %v415 = vmul.f32 %v414, %v333
        %v416 = vld [vmem:[%s3] sm:$0x1]
        %v418 = vlaneseq
        %v419 = vshrl.u32 %v418, 7
        %v420 = vsub.s32 0, %v419
        %v421 = vrot.slane %v416, %v420
        %v423 = vadd.f32 %v415, %v421
        %424 = vst [vmem:[%s263] sm:$0xff] %v423
        %s425 = sand.u32 %s126, 1
        %s426 = scalar_lea.sflag [#allocation4], %s425
        %s427 = sand.u32 %s126, 1
        %s428 = smul.addr %s427, 8
        %s429 = scalar_lea.vmem [#allocation8], %s428
        // Predicated region
        $region49: #{tpu_custom_call.1} parent=35 // pred_check
          %p430 = pneg %p136
        $region50: #{tpu_custom_call.1} parent=35 // pred_check_branch
          %432 = sbr.rel (%p430) target = $region52
        $region51: #{tpu_custom_call.1} parent=35 // pred_region
          %s434 = ssub.s32 128, 128
          %435 = vsyncadd %s426, %s434
          %s436 = smul.addr %s24, 128
          %s437 = scalar_lea.hbm %s4, %s436
          %s439 = sshll.u32 %s429, 4
          %s440 = int_to_ptr.vmem [resolvable:$true] %s439
          %442 = dma.vmem_to_hbm [thread:$0]  %s440, 128, %s437, %s426
        $region52: #{tpu_custom_call.1} parent=35 // pred_fallthru
          _
      $region36: #{tpu_custom_call.1} parent=5 // pred_fallthru
        _
      %p443 = scmp.le.s32.totalorder 2, %s19
      // Predicated region
      $region53: #{tpu_custom_call.1} parent=5 // pred_check
        %p444 = pneg %p443
      $region54: #{tpu_custom_call.1} parent=5 // pred_check_branch
        %446 = sbr.rel (%p444) target = $region56
      $region55: #{tpu_custom_call.1} parent=5 // pred_region
        %s447 = ssub.s32 %s19, 2
        // Predicated region
        $region57: #{tpu_custom_call.1} parent=55 // pred_check
          %p448 = pneg %p142
        $region58: #{tpu_custom_call.1} parent=55 // pred_check_branch
          %450 = sbr.rel (%p448) target = $region60
        $region59: #{tpu_custom_call.1} parent=55 // pred_region
          %s451 = sand.u32 %s127, 1
          %s452 = scalar_lea.sflag [#allocation4], %s451
          %s453 = sand.u32 %s127, 1
          %s454 = smul.addr %s453, 8
          %s455 = scalar_lea.vmem [#allocation8], %s454
          %456 = dma.done %s452, 128
        $region60: #{tpu_custom_call.1} parent=55 // pred_fallthru
          _
      $region56: #{tpu_custom_call.1} parent=5 // pred_fallthru
        _
    $region6: #{tpu_custom_call.1} parent=1 // loop_footer
      %s23 = sadd.s32 1, %s19
    $region7: #{tpu_custom_call.1} parent=1 // loop_footer_branch
      %18 = sbr.rel target = $region3
    $region8: #{tpu_custom_call.1} parent=1 // loop_exit
      _
    %457 = vsyncpa [#allocation3], 1
    %s458 = scalar_lea.sflag [#allocation3], 1
    %459 = vsyncpa %s458, 1
    %460 = vsyncpa [#allocation6], 1
    %s461 = scalar_lea.sflag [#allocation6], 1
    %462 = vsyncpa %s461, 1
    %463 = vsyncpa [#allocation4], 1
    %s464 = scalar_lea.sflag [#allocation4], 1
    %465 = vsyncpa %s464, 1

</llo_original>
